<compile_context>
chip_gen: v5e
topology: v5e:2x2
jax: 0.10.0
libtpu: 0.0.40
codegen_flags: <defaults>
</compile_context>

<pallas_src>
import functools

import jax
import jax.numpy as jnp
from jax.experimental import pallas as pl
from jax.experimental.pallas import tpu as pltpu


def _round_up(x, m):
    return (x + m - 1) // m * m


def _coupling_fwd_kernel(x_ref, wf_ref, bf_ref, wg_ref, bg_ref, y_ref):
    """Fused additive-coupling forward on one (TM, C) row tile."""
    h = wf_ref.shape[0]

    x1 = x_ref[:, :h]                      # f32, lane-aligned slice (h % 128 == 0)
    x2 = x_ref[:, h:]                      # f32

    # F(x2) = relu(x2 @ Wf + bf)  -- bf16 MXU operands, f32 accumulate,
    # elementwise in f32.
    f = jnp.dot(x2.astype(jnp.bfloat16), wf_ref[...],
                preferred_element_type=jnp.float32)
    f = jnp.maximum(f + bf_ref[...], 0.0)
    y1 = x1 + f                            # keep f32 y1 for store + residual

    # G(y1) = relu(y1 @ Wg + bg) -- only a bf16 *copy* of y1 feeds the MXU.
    g = jnp.dot(y1.astype(jnp.bfloat16), wg_ref[...],
                preferred_element_type=jnp.float32)
    g = jnp.maximum(g + bg_ref[...], 0.0)
    y2 = x2 + g

    y_ref[:, :h] = y1.astype(y_ref.dtype)  # lane-aligned, unmasked stores
    y_ref[:, h:] = y2.astype(y_ref.dtype)


@functools.partial(jax.jit, static_argnames=("tm",))
def coupling_forward_pallas(x, wf, bf, wg, bg, *, tm=512):
    """Row-tiled Pallas call: grid over node rows, weights VMEM-resident."""
    N, C = x.shape
    h = C // 2
    assert h % 128 == 0, "feature half-width must be lane-dense (multiple of 128)"
    assert wf.shape == (h, h) and wg.shape == (h, h)

    tm = min(tm, _round_up(N, 8))
    n_pad = _round_up(N, tm)
    if n_pad != N:
        x = jnp.pad(x, ((0, n_pad - N), (0, 0)))
    grid = (n_pad // tm,)

    # double-buffered in + out tiles (f32) + resident bf16 weights / f32 biases
    per_step_bytes = 2 * 2 * tm * C * 4
    weight_bytes = 2 * (h * h * 2 + h * 4)
    vmem_limit = min(48 * 1024 * 1024,                      # headroom on v7x (64 MiB)
                     max(per_step_bytes + weight_bytes + (4 << 20), 16 << 20))

    out = pl.pallas_call(
        _coupling_fwd_kernel,
        out_shape=jax.ShapeDtypeStruct((n_pad, C), x.dtype),
        grid=grid,
        in_specs=[
            pl.BlockSpec((tm, C), lambda i: (i, 0)),        # activations: tiled rows
            pl.BlockSpec((h, h), lambda i: (0, 0)),         # Wf: resident
            pl.BlockSpec((1, h), lambda i: (0, 0)),         # bf: resident
            pl.BlockSpec((h, h), lambda i: (0, 0)),         # Wg: resident
            pl.BlockSpec((1, h), lambda i: (0, 0)),         # bg: resident
        ],
        out_specs=pl.BlockSpec((tm, C), lambda i: (i, 0)),
        compiler_params=pltpu.CompilerParams(
            dimension_semantics=("parallel",),              # megacore on v7x
            vmem_limit_bytes=int(vmem_limit)),
    )(x, wf, bf, wg, bg)

    return out[:N] if n_pad != N else out


def _reference_forward(x, wf, bf, wg, bg):
    """Pure-JAX reference with the same bf16-MXU / f32-elementwise arithmetic."""
    h = wf.shape[0]
    x1, x2 = x[:, :h], x[:, h:]
    f = jnp.maximum(jnp.dot(x2.astype(jnp.bfloat16), wf,
                            preferred_element_type=jnp.float32) + bf, 0.0)
    y1 = x1 + f
    g = jnp.maximum(jnp.dot(y1.astype(jnp.bfloat16), wg,
                            preferred_element_type=jnp.float32) + bg, 0.0)
    y2 = x2 + g
    return jnp.concatenate([y1, y2], axis=-1)


class InvertibleCouplingFn:
    """The invertible `fn` wrapped by InvertibleModuleWrapper."""

    def __init__(self, hidden, key):
        k1, k2 = jax.random.split(key)
        h = hidden // 2
        # weights stored bf16 (MXU-native); biases stay f32 (elementwise path)
        self.wf = (jax.random.normal(k1, (h, h), jnp.float32) * 0.1).astype(jnp.bfloat16)
        self.bf = jnp.zeros((1, h), jnp.float32)
        self.wg = (jax.random.normal(k2, (h, h), jnp.float32) * 0.1).astype(jnp.bfloat16)
        self.bg = jnp.zeros((1, h), jnp.float32)

    def forward(self, x):
        return coupling_forward_pallas(x, self.wf, self.bf, self.wg, self.bg)

    def inverse(self, y):
        # pure-JAX inverse using the SAME bf16-matmul / f32-accumulate
        # arithmetic as the forward, so additive-coupling reconstruction is
        # (numerically) exact.
        h = y.shape[-1] // 2
        y1, y2 = y[:, :h], y[:, h:]
        g = jnp.maximum(jnp.dot(y1.astype(jnp.bfloat16), self.wg,
                                preferred_element_type=jnp.float32) + self.bg, 0.0)
        x2 = y2 - g
        f = jnp.maximum(jnp.dot(x2.astype(jnp.bfloat16), self.wf,
                                preferred_element_type=jnp.float32) + self.bf, 0.0)
        x1 = y1 - f
        return jnp.concatenate([x1, x2], axis=-1)


class InvertibleModuleWrapper:
    """JAX analogue of the PyTorch wrapper: forward values == fn.forward(x)."""
    # TODO(synk): backward-pass input reconstruction (storage().resize_(0) +
    # fn_inverse, preserve_rng_state) is autograd/memory management with no
    # forward compute; it is not reproduced here.

    def __init__(self, fn, keep_input=False, keep_input_inverse=False,
                 num_bwd_passes=1, disable=False, preserve_rng_state=False):
        self.disable = disable
        self.keep_input = keep_input
        self.keep_input_inverse = keep_input_inverse
        self.num_bwd_passes = num_bwd_passes
        self.preserve_rng_state = preserve_rng_state
        self._fn = fn

    def forward(self, *xin):
        y = self._fn.forward(*xin)
        if isinstance(y, tuple) and len(y) == 1:
            return y[0]
        return y

    def inverse(self, *yin):
        x = self._fn.inverse(*yin)
        if isinstance(x, tuple) and len(x) == 1:
            return x[0]
        return x


if __name__ == "__main__":
    key = jax.random.PRNGKey(0)
    k_x, k_p = jax.random.split(key)

    # small but lane-dense shapes: 16 nodes, 256 features (split into 2 x 128)
    N, C = 16, 256
    x = jax.random.normal(k_x, (N, C), jnp.float32)

    fn = InvertibleCouplingFn(hidden=C, key=k_p)
    wrapper = InvertibleModuleWrapper(fn, keep_input=False)

    y = jax.block_until_ready(wrapper.forward(x))
    assert y.shape == (N, C) and y.dtype == jnp.float32

    # correctness: Pallas forward vs pure-JAX reference (same arithmetic)
    y_ref = jax.block_until_ready(
        _reference_forward(x, fn.wf, fn.bf, fn.wg, fn.bg))
    assert jnp.allclose(y, y_ref, atol=2e-3, rtol=2e-3), "forward mismatch"

    # sanity: the wrapped fn is actually invertible (x ~= fn.inverse(fn(x)))
    x_rec = jax.block_until_ready(wrapper.inverse(y))
    assert jnp.allclose(x_rec, x, atol=2e-3, rtol=2e-3), "inverse reconstruction failed"

    print("KERNEL_OK")
</pallas_src>

<mosaic_0001>
module attributes {stable_mosaic.version = 11 : i64} {
  func.func @_coupling_fwd_kernel(%arg0: i32, %arg1: memref<16x256xf32, #tpu.memory_space<vmem>>, %arg2: memref<128x128xbf16, #tpu.memory_space<vmem>>, %arg3: memref<1x128xf32, #tpu.memory_space<vmem>>, %arg4: memref<128x128xbf16, #tpu.memory_space<vmem>>, %arg5: memref<1x128xf32, #tpu.memory_space<vmem>>, %arg6: memref<16x256xf32, #tpu.memory_space<vmem>>) attributes {dimension_semantics = [#tpu.dimension_semantics<parallel>], iteration_bounds = array<i64: 1>, scalar_prefetch = 0 : i64, scratch_operands = 0 : i64, tpu.core_type = #tpu.core_type<tc>, window_params = [{transform_indices = @transform_0, window_bounds = array<i64: 16, 256>}, {pipeline_mode = #tpu.pipeline_mode<synchronous>, transform_indices = @transform_1, window_bounds = array<i64: 128, 128>}, {pipeline_mode = #tpu.pipeline_mode<synchronous>, transform_indices = @transform_2, window_bounds = array<i64: 1, 128>}, {pipeline_mode = #tpu.pipeline_mode<synchronous>, transform_indices = @transform_3, window_bounds = array<i64: 128, 128>}, {pipeline_mode = #tpu.pipeline_mode<synchronous>, transform_indices = @transform_4, window_bounds = array<i64: 1, 128>}, {transform_indices = @transform_5, window_bounds = array<i64: 16, 256>}]} {
    %c0 = arith.constant 0 : index
    %c0_0 = arith.constant 0 : index
    %0 = vector.load %arg1[%c0, %c0_0] : memref<16x256xf32, #tpu.memory_space<vmem>>, vector<16x128xf32>
    %c0_1 = arith.constant 0 : index
    %c128 = arith.constant 128 : index
    %1 = vector.load %arg1[%c0_1, %c128] : memref<16x256xf32, #tpu.memory_space<vmem>>, vector<16x128xf32>
    %2 = arith.truncf %1 : vector<16x128xf32> to vector<16x128xbf16>
    %c0_2 = arith.constant 0 : index
    %c0_3 = arith.constant 0 : index
    %3 = vector.load %arg2[%c0_2, %c0_3] : memref<128x128xbf16, #tpu.memory_space<vmem>>, vector<128x128xbf16>
    %cst = arith.constant dense<0.000000e+00> : vector<16x128xf32>
    %4 = tpu.matmul %2, %3, %cst {dimension_numbers = #tpu.dot_dimension_numbers<[1], [0], [0], [1], [0, 0, 1, 1], [], []>} : vector<16x128xbf16>, vector<128x128xbf16>, vector<16x128xf32> -> vector<16x128xf32>
    %c0_4 = arith.constant 0 : index
    %c0_5 = arith.constant 0 : index
    %5 = vector.load %arg3[%c0_4, %c0_5] : memref<1x128xf32, #tpu.memory_space<vmem>>, vector<1x128xf32>
    %6 = vector.broadcast %5 : vector<1x128xf32> to vector<16x128xf32>
    %7 = arith.addf %4, %6 : vector<16x128xf32>
    %cst_6 = arith.constant 0.000000e+00 : f32
    %8 = vector.broadcast %cst_6 : f32 to vector<16x128xf32>
    %9 = arith.maximumf %7, %8 : vector<16x128xf32>
    %10 = arith.addf %0, %9 : vector<16x128xf32>
    %11 = arith.truncf %10 : vector<16x128xf32> to vector<16x128xbf16>
    %c0_7 = arith.constant 0 : index
    %c0_8 = arith.constant 0 : index
    %12 = vector.load %arg4[%c0_7, %c0_8] : memref<128x128xbf16, #tpu.memory_space<vmem>>, vector<128x128xbf16>
    %cst_9 = arith.constant dense<0.000000e+00> : vector<16x128xf32>
    %13 = tpu.matmul %11, %12, %cst_9 {dimension_numbers = #tpu.dot_dimension_numbers<[1], [0], [0], [1], [0, 0, 1, 1], [], []>} : vector<16x128xbf16>, vector<128x128xbf16>, vector<16x128xf32> -> vector<16x128xf32>
    %c0_10 = arith.constant 0 : index
    %c0_11 = arith.constant 0 : index
    %14 = vector.load %arg5[%c0_10, %c0_11] : memref<1x128xf32, #tpu.memory_space<vmem>>, vector<1x128xf32>
    %15 = vector.broadcast %14 : vector<1x128xf32> to vector<16x128xf32>
    %16 = arith.addf %13, %15 : vector<16x128xf32>
    %cst_12 = arith.constant 0.000000e+00 : f32
    %17 = vector.broadcast %cst_12 : f32 to vector<16x128xf32>
    %18 = arith.maximumf %16, %17 : vector<16x128xf32>
    %19 = arith.addf %1, %18 : vector<16x128xf32>
    %c0_13 = arith.constant 0 : index
    %c0_14 = arith.constant 0 : index
    %20 = vector.load %arg6[%c0_13, %c0_14] : memref<16x256xf32, #tpu.memory_space<vmem>>, vector<16x128xf32>
    tpu.vector_store %arg6[%c0_13, %c0_14], %10 {strides = array<i32>} : memref<16x256xf32, #tpu.memory_space<vmem>>, vector<16x128xf32>,
    %c0_15 = arith.constant 0 : index
    %c128_16 = arith.constant 128 : index
    %21 = vector.load %arg6[%c0_15, %c128_16] : memref<16x256xf32, #tpu.memory_space<vmem>>, vector<16x128xf32>
    tpu.vector_store %arg6[%c0_15, %c128_16], %19 {strides = array<i32>} : memref<16x256xf32, #tpu.memory_space<vmem>>, vector<16x128xf32>,
    return
  }
  func.func @transform_0(%arg0: i32) -> (i32, i32) {
    %c0_i32 = arith.constant 0 : i32
    %c0_i32_0 = arith.constant 0 : i32
    return %arg0, %c0_i32 : i32, i32
  }
  func.func @transform_1(%arg0: i32) -> (i32, i32) {
    %c0_i32 = arith.constant 0 : i32
    %c0_i32_0 = arith.constant 0 : i32
    %c0_i32_1 = arith.constant 0 : i32
    return %c0_i32, %c0_i32_0 : i32, i32
  }
  func.func @transform_2(%arg0: i32) -> (i32, i32) {
    %c0_i32 = arith.constant 0 : i32
    %c0_i32_0 = arith.constant 0 : i32
    %c0_i32_1 = arith.constant 0 : i32
    return %c0_i32, %c0_i32_0 : i32, i32
  }
  func.func @transform_3(%arg0: i32) -> (i32, i32) {
    %c0_i32 = arith.constant 0 : i32
    %c0_i32_0 = arith.constant 0 : i32
    %c0_i32_1 = arith.constant 0 : i32
    return %c0_i32, %c0_i32_0 : i32, i32
  }
  func.func @transform_4(%arg0: i32) -> (i32, i32) {
    %c0_i32 = arith.constant 0 : i32
    %c0_i32_0 = arith.constant 0 : i32
    %c0_i32_1 = arith.constant 0 : i32
    return %c0_i32, %c0_i32_0 : i32, i32
  }
  func.func @transform_5(%arg0: i32) -> (i32, i32) {
    %c0_i32 = arith.constant 0 : i32
    %c0_i32_0 = arith.constant 0 : i32
    return %arg0, %c0_i32 : i32, i32
  }
}

</mosaic_0001>

<llo_original>
// kernel: coupling_forward_pallas.1
$region0: #{coupling_forward_pallas.1}
  #allocation0 [shape = 'u32[]', space=smem, size = 0x4, offset = 0x4, fixed_abs, tag = 'smem constant byte address 0x4 - core index']
  #allocation1 [shape = 'u32[72,128]{1,0:T(1,128)}', space=vmem, size = 0x9000, scoped, tag = 'internal scratch']
  %s0 = inlined_call_operand.hbm [shape: f32[16,256], index: 0, kind: input, shape index: {}]
  %s1 = inlined_call_operand.hbm [shape: bf16[128,128], index: 1, kind: input, shape index: {}]
  %s2 = inlined_call_operand.vmem [shape: f32[1,128], index: 2, kind: input, shape index: {}]
  %s3 = inlined_call_operand.hbm [shape: bf16[128,128], index: 3, kind: input, shape index: {}]
  %s4 = inlined_call_operand.vmem [shape: f32[1,128], index: 4, kind: input, shape index: {}]
  %s5 = inlined_call_operand.hbm [shape: f32[16,256], index: 5, kind: output, shape index: {}]
  %s6 = sld [smem:[#allocation0]]
  $region42: #{coupling_forward_pallas.1} parent=0
    _
  %s8 = ssub.s32 1, %s6
  %s9 = scalar_select 0, %s8, %s6
  $region1: #{coupling_forward_pallas.1} parent=0
    #allocation2 [shape = 'u8[16384]{0}', space=vmem, size = 0x4000, scoped, tag = 'input window, operand 0, single buffered']
    #allocation3 [shape = 's32[1]{0}', space=sflag, size = 0x4, scoped, tag = 'scoped memory for coupling_forward_pallas.1']
    #allocation4 [shape = 's32[1]{0}', space=sflag, size = 0x4, scoped, tag = 'scoped memory for coupling_forward_pallas.1']
    #allocation5 [shape = 'u8[32768]{0}', space=vmem, size = 0x8000, scoped, tag = 'input window, operand 1, single buffered']
    #allocation6 [shape = 's32[1]{0}', space=sflag, size = 0x4, scoped, tag = 'scoped memory for coupling_forward_pallas.1']
    #allocation7 [shape = 'u8[32768]{0}', space=vmem, size = 0x8000, scoped, tag = 'input window, operand 3, single buffered']
    #allocation8 [shape = 'u8[16384]{0}', space=vmem, size = 0x4000, scoped, tag = 'output window, operand 0, single buffered']
    %10 = vsyncpa [#allocation3], 0
    %11 = vsyncpa [#allocation6], 0
    %12 = vsyncpa [#allocation4], 0
    // Predicated region
    $region2: #{coupling_forward_pallas.1} parent=1 // pred_check
      _
    $region3: #{coupling_forward_pallas.1} parent=1 // pred_check_branch
      %14 = sbr.rel (0) target = $region5
    $region4: #{coupling_forward_pallas.1} parent=1 // pred_region
      %16 = vsyncadd [#allocation3], 0
      %s17 = sshll.u32 %s0, 4
      %s18 = int_to_ptr.hbm [resolvable:$true] %s17
      %s19 = sshll.u32 [#allocation2], 4
      %s20 = int_to_ptr.vmem [resolvable:$true] %s19
      %25 = dma.hbm_to_vmem [thread:$0]  %s18, 512, %s20, [#allocation3], 256, 256, 16
    $region5: #{coupling_forward_pallas.1} parent=1 // pred_fallthru
      _
    // Predicated region
    $region6: #{coupling_forward_pallas.1} parent=1 // pred_check
      _
    $region7: #{coupling_forward_pallas.1} parent=1 // pred_check_branch
      %27 = sbr.rel (0) target = $region9
    $region8: #{coupling_forward_pallas.1} parent=1 // pred_region
      %29 = vsyncadd [#allocation6], 0
      %s30 = sshll.u32 %s1, 4
      %s31 = int_to_ptr.hbm [resolvable:$true] %s30
      %s32 = sshll.u32 [#allocation5], 4
      %s33 = int_to_ptr.vmem [resolvable:$true] %s32
      %38 = dma.hbm_to_vmem [thread:$0]  %s31, 1024, %s33, [#allocation6], 64, 64, 4
    $region9: #{coupling_forward_pallas.1} parent=1 // pred_fallthru
      _
    // Predicated region
    $region10: #{coupling_forward_pallas.1} parent=1 // pred_check
      _
    $region11: #{coupling_forward_pallas.1} parent=1 // pred_check_branch
      %40 = sbr.rel (0) target = $region13
    $region12: #{coupling_forward_pallas.1} parent=1 // pred_region
      _
    $region13: #{coupling_forward_pallas.1} parent=1 // pred_fallthru
      _
    // Predicated region
    $region14: #{coupling_forward_pallas.1} parent=1 // pred_check
      _
    $region15: #{coupling_forward_pallas.1} parent=1 // pred_check_branch
      %42 = sbr.rel (0) target = $region17
    $region16: #{coupling_forward_pallas.1} parent=1 // pred_region
      %44 = vsyncadd [#allocation6], 0
      %s45 = sshll.u32 %s3, 4
      %s46 = int_to_ptr.hbm [resolvable:$true] %s45
      %s47 = sshll.u32 [#allocation7], 4
      %s48 = int_to_ptr.vmem [resolvable:$true] %s47
      %53 = dma.hbm_to_vmem [thread:$0]  %s46, 1024, %s48, [#allocation6], 64, 64, 4
    $region17: #{coupling_forward_pallas.1} parent=1 // pred_fallthru
      _
    // Predicated region
    $region18: #{coupling_forward_pallas.1} parent=1 // pred_check
      _
    $region19: #{coupling_forward_pallas.1} parent=1 // pred_check_branch
      %55 = sbr.rel (0) target = $region21
    $region20: #{coupling_forward_pallas.1} parent=1 // pred_region
      _
    $region21: #{coupling_forward_pallas.1} parent=1 // pred_fallthru
      _
    // Predicated region
    $region22: #{coupling_forward_pallas.1} parent=1 // pred_check
      _
    $region23: #{coupling_forward_pallas.1} parent=1 // pred_check_branch
      %57 = sbr.rel (0) target = $region25
    $region24: #{coupling_forward_pallas.1} parent=1 // pred_region
      %59 = dma.done [#allocation3], 512
    $region25: #{coupling_forward_pallas.1} parent=1 // pred_fallthru
      _
    // Predicated region
    $region26: #{coupling_forward_pallas.1} parent=1 // pred_check
      _
    $region27: #{coupling_forward_pallas.1} parent=1 // pred_check_branch
      %61 = sbr.rel (0) target = $region29
    $region28: #{coupling_forward_pallas.1} parent=1 // pred_region
      %63 = dma.done [#allocation6], 1024
    $region29: #{coupling_forward_pallas.1} parent=1 // pred_fallthru
      _
    // Predicated region
    $region30: #{coupling_forward_pallas.1} parent=1 // pred_check
      _
    $region31: #{coupling_forward_pallas.1} parent=1 // pred_check_branch
      %65 = sbr.rel (0) target = $region33
    $region32: #{coupling_forward_pallas.1} parent=1 // pred_region
      %67 = dma.done [#allocation6], 1024
    $region33: #{coupling_forward_pallas.1} parent=1 // pred_fallthru
      _
    %v68 = vld [vmem:[#allocation2] sm:$0xff]
    %v69 = vld [vmem:[#allocation2 + $0x10] sm:$0xff]
    %v70 = vld [vmem:[#allocation2 + $0x8] sm:$0xff]
    %v71 = vld [vmem:[#allocation2 + $0x18] sm:$0xff]
    %v72 = vpack.c.bf16 %v71, %v70
    %v73 = vld [vmem:[#allocation5] sm:$0xf]
    %v74 = vld [vmem:[#allocation5 + $0x4] sm:$0xf]
    %v75 = vld [vmem:[#allocation5 + $0x8] sm:$0xf]
    %v76 = vld [vmem:[#allocation5 + $0xc] sm:$0xf]
    %v77 = vld [vmem:[#allocation5 + $0x10] sm:$0xf]
    %v78 = vld [vmem:[#allocation5 + $0x14] sm:$0xf]
    %v79 = vld [vmem:[#allocation5 + $0x18] sm:$0xf]
    %v80 = vld [vmem:[#allocation5 + $0x1c] sm:$0xf]
    %v81 = vld [vmem:[#allocation5 + $0x20] sm:$0xf]
    %v82 = vld [vmem:[#allocation5 + $0x24] sm:$0xf]
    %v83 = vld [vmem:[#allocation5 + $0x28] sm:$0xf]
    %v84 = vld [vmem:[#allocation5 + $0x2c] sm:$0xf]
    %v85 = vld [vmem:[#allocation5 + $0x30] sm:$0xf]
    %v86 = vld [vmem:[#allocation5 + $0x34] sm:$0xf]
    %v87 = vld [vmem:[#allocation5 + $0x38] sm:$0xf]
    %v88 = vld [vmem:[#allocation5 + $0x3c] sm:$0xf]
    %v89 = vld [vmem:[%s2] sm:$0x1]
    %v91 = vperm.slane %v89, 0
    %v109 = vunpack.c.l.b16 %v73
    %v110 = vunpack.c.l.b16 %v74
    %v111 = vunpack.c.l.b16 %v75
    %v112 = vunpack.c.l.b16 %v76
    %v113 = vunpack.c.l.b16 %v77
    %v114 = vunpack.c.l.b16 %v78
    %v115 = vunpack.c.l.b16 %v79
    %v116 = vunpack.c.l.b16 %v80
    %v117 = vunpack.c.l.b16 %v81
    %v118 = vunpack.c.l.b16 %v82
    %v119 = vunpack.c.l.b16 %v83
    %v120 = vunpack.c.l.b16 %v84
    %v121 = vunpack.c.l.b16 %v85
    %v122 = vunpack.c.l.b16 %v86
    %v123 = vunpack.c.l.b16 %v87
    %v124 = vunpack.c.l.b16 %v88
    %v125 = vpack.c.b16 %v110, %v109
    %v126 = vpack.c.b16 %v112, %v111
    %v127 = vpack.c.b16 %v114, %v113
    %v128 = vpack.c.b16 %v116, %v115
    %v129 = vpack.c.b16 %v118, %v117
    %v130 = vpack.c.b16 %v120, %v119
    %v131 = vpack.c.b16 %v122, %v121
    %v132 = vpack.c.b16 %v124, %v123
    %141 = vmatpush.bf16.msra.mxu0 %v132
    %142 = vmatpush.bf16.msra.mxu0 %v131
    %143 = vmatpush.bf16.msra.mxu0 %v130
    %144 = vmatpush.bf16.msra.mxu0 %v129
    %145 = vmatpush.bf16.msra.mxu0 %v128
    %146 = vmatpush.bf16.msra.mxu0 %v127
    %147 = vmatpush.bf16.msra.mxu0 %v126
    %148 = vmatpush.bf16.msra.mxu0 %v125
    %149 = vmatmul.bf16.gmra.mxu0 %v72
    %v150 = vpop.f32.mrf.mxu0
    %v151 = vadd.f32 %v91, %v150
    %v152 = vpop.f32.mrf.mxu0
    %v153 = vadd.f32 %v91, %v152
    %154 = vdwg.mxu0
    %v155 = vmax.f32 %v151, 0.0
    %v156 = vmax.f32 %v153, 0.0
    %v157 = vadd.f32 %v68, %v155
    %v158 = vadd.f32 %v69, %v156
    %v159 = vpack.c.bf16 %v158, %v157
    %v160 = vld [vmem:[#allocation7] sm:$0xf]
    %v161 = vld [vmem:[#allocation7 + $0x4] sm:$0xf]
    %v162 = vld [vmem:[#allocation7 + $0x8] sm:$0xf]
    %v163 = vld [vmem:[#allocation7 + $0xc] sm:$0xf]
    %v164 = vld [vmem:[#allocation7 + $0x10] sm:$0xf]
    %v165 = vld [vmem:[#allocation7 + $0x14] sm:$0xf]
    %v166 = vld [vmem:[#allocation7 + $0x18] sm:$0xf]
    %v167 = vld [vmem:[#allocation7 + $0x1c] sm:$0xf]
    %v168 = vld [vmem:[#allocation7 + $0x20] sm:$0xf]
    %v169 = vld [vmem:[#allocation7 + $0x24] sm:$0xf]
    %v170 = vld [vmem:[#allocation7 + $0x28] sm:$0xf]
    %v171 = vld [vmem:[#allocation7 + $0x2c] sm:$0xf]
    %v172 = vld [vmem:[#allocation7 + $0x30] sm:$0xf]
    %v173 = vld [vmem:[#allocation7 + $0x34] sm:$0xf]
    %v174 = vld [vmem:[#allocation7 + $0x38] sm:$0xf]
    %v175 = vld [vmem:[#allocation7 + $0x3c] sm:$0xf]
    %v176 = vld [vmem:[%s4] sm:$0x1]
    %v178 = vperm.slane %v176, 0
    %v196 = vunpack.c.l.b16 %v160
    %v197 = vunpack.c.l.b16 %v161
    %v198 = vunpack.c.l.b16 %v162
    %v199 = vunpack.c.l.b16 %v163
    %v200 = vunpack.c.l.b16 %v164
    %v201 = vunpack.c.l.b16 %v165
    %v202 = vunpack.c.l.b16 %v166
    %v203 = vunpack.c.l.b16 %v167
    %v204 = vunpack.c.l.b16 %v168
    %v205 = vunpack.c.l.b16 %v169
    %v206 = vunpack.c.l.b16 %v170
    %v207 = vunpack.c.l.b16 %v171
    %v208 = vunpack.c.l.b16 %v172
    %v209 = vunpack.c.l.b16 %v173
    %v210 = vunpack.c.l.b16 %v174
    %v211 = vunpack.c.l.b16 %v175
    %v212 = vpack.c.b16 %v197, %v196
    %v213 = vpack.c.b16 %v199, %v198
    %v214 = vpack.c.b16 %v201, %v200
    %v215 = vpack.c.b16 %v203, %v202
    %v216 = vpack.c.b16 %v205, %v204
    %v217 = vpack.c.b16 %v207, %v206
    %v218 = vpack.c.b16 %v209, %v208
    %v219 = vpack.c.b16 %v211, %v210
    %228 = vmatpush.bf16.msra.mxu0 %v219
    %229 = vmatpush.bf16.msra.mxu0 %v218
    %230 = vmatpush.bf16.msra.mxu0 %v217
    %231 = vmatpush.bf16.msra.mxu0 %v216
    %232 = vmatpush.bf16.msra.mxu0 %v215
    %233 = vmatpush.bf16.msra.mxu0 %v214
    %234 = vmatpush.bf16.msra.mxu0 %v213
    %235 = vmatpush.bf16.msra.mxu0 %v212
    %236 = vmatmul.bf16.gmra.mxu0 %v159
    %v237 = vpop.f32.mrf.mxu0
    %v238 = vadd.f32 %v178, %v237
    %v239 = vpop.f32.mrf.mxu0
    %v240 = vadd.f32 %v178, %v239
    %241 = vdwg.mxu0
    %v242 = vmax.f32 %v238, 0.0
    %v243 = vmax.f32 %v240, 0.0
    %v244 = vadd.f32 %v70, %v242
    %v245 = vadd.f32 %v71, %v243
    %246 = vst [vmem:[#allocation8] sm:$0xff] %v157
    %247 = vst [vmem:[#allocation8 + $0x10] sm:$0xff] %v158
    %248 = vst [vmem:[#allocation8 + $0x8] sm:$0xff] %v244
    %249 = vst [vmem:[#allocation8 + $0x18] sm:$0xff] %v245
    // Predicated region
    $region34: #{coupling_forward_pallas.1} parent=1 // pred_check
      _
    $region35: #{coupling_forward_pallas.1} parent=1 // pred_check_branch
      %251 = sbr.rel (0) target = $region37
    $region36: #{coupling_forward_pallas.1} parent=1 // pred_region
      %253 = vsyncadd [#allocation4], 0
      %s254 = sshll.u32 [#allocation8], 4
      %s255 = int_to_ptr.vmem [resolvable:$true] %s254
      %s256 = sshll.u32 %s5, 4
      %s257 = int_to_ptr.hbm [resolvable:$true] %s256
      %262 = dma.vmem_to_hbm [thread:$0]  %s255, 512, %s257, [#allocation4], 256, 256, 16
    $region37: #{coupling_forward_pallas.1} parent=1 // pred_fallthru
      _
    // Predicated region
    $region38: #{coupling_forward_pallas.1} parent=1 // pred_check
      _
    $region39: #{coupling_forward_pallas.1} parent=1 // pred_check_branch
      %264 = sbr.rel (0) target = $region41
    $region40: #{coupling_forward_pallas.1} parent=1 // pred_region
      %266 = dma.done [#allocation4], 512
    $region41: #{coupling_forward_pallas.1} parent=1 // pred_fallthru
      _
    %267 = vsyncpa [#allocation3], 1
    %268 = vsyncpa [#allocation6], 1
    %269 = vsyncpa [#allocation4], 1

</llo_original>
